<compile_context>
chip_gen: v6e
topology: v6e:2x2x1
jax: 0.10.0
libtpu: 0.0.40
codegen_flags: <defaults>
</compile_context>

<pallas_src>
import functools

import jax
import jax.numpy as jnp
from jax.experimental import pallas as pl
from jax.experimental.pallas import tpu as pltpu

_EPS = 1e-8  # nn.CosineSimilarity default eps


def _cdiv(a, b):
    return -(-a // b)


def _partial_sums_kernel(sa_ref, ua_ref, sb_ref, ub_ref, out_ref, *,
                         steps_per_split, tile_d, d_total, need_mask):
    """For the D-range owned by split p = program_id(0), accumulate
         out[0]+=sum_d sa*ua  out[1]+=sum_d sa*sa  out[2]+=sum_d ua*ua
         out[3]+=sum_d sb*ub  out[4]+=sum_d sb*sb  out[5]+=sum_d ub*ub
    into this split's (1, 6, N, 1) output block (accumulator-in-output)."""
    k = pl.program_id(1)

    @pl.when(k == 0)
    def _init():
        out_ref[...] = jnp.zeros_like(out_ref)

    # Inputs stay in their native dtype in HBM/VMEM; cast per tile at point of
    # use, accumulate in f32.
    sa = sa_ref[...].astype(jnp.float32)
    ua = ua_ref[...].astype(jnp.float32)
    sb = sb_ref[...].astype(jnp.float32)
    ub = ub_ref[...].astype(jnp.float32)

    if need_mask:
        # Logical (unclamped) global column range of this tile. Tiles whose
        # range extends past D (the partial tail tile, plus any fully
        # out-of-range tiles whose DMA the index_map clamped onto the last
        # valid tile) are masked here so unspecified padding / replayed data
        # contributes exactly zero.
        p = pl.program_id(0)
        col0 = (p * steps_per_split + k) * tile_d
        col = col0 + jax.lax.broadcasted_iota(jnp.int32, (1, tile_d), 1)
        mask = col < d_total
        zero = jnp.float32(0.0)
        sa = jnp.where(mask, sa, zero)
        ua = jnp.where(mask, ua, zero)
        sb = jnp.where(mask, sb, zero)
        ub = jnp.where(mask, ub, zero)

    out_ref[0, 0] += jnp.sum(sa * ua, axis=1, keepdims=True)
    out_ref[0, 1] += jnp.sum(sa * sa, axis=1, keepdims=True)
    out_ref[0, 2] += jnp.sum(ua * ua, axis=1, keepdims=True)
    out_ref[0, 3] += jnp.sum(sb * ub, axis=1, keepdims=True)
    out_ref[0, 4] += jnp.sum(sb * sb, axis=1, keepdims=True)
    out_ref[0, 5] += jnp.sum(ub * ub, axis=1, keepdims=True)


def _vmem_capacity_bytes():
    try:
        info = pltpu.get_tpu_info()
        cap = getattr(info, "vmem_capacity_bytes", None)
        if cap:
            return int(cap)
    except Exception:
        pass
    return 64 * 1024 * 1024  # v7x-safe fallback


def _plan(n, d, itemsize):
    """Pick (num_splits, steps_per_split, tile_d, vmem_limit). ~1/3 of the
    scoped VMEM request goes to the 4 double-buffered input blocks; the rest
    is headroom for f32 casts / elementwise temporaries and the tiny output.
    Assumes N is a (modest) batch size, as implied by the batch-level loss."""
    cap = _vmem_capacity_bytes()
    # 40 MiB on v7x (64 MiB physical), 80 MiB on v5e/v6e (128 MiB physical).
    vmem_limit = min(cap * 5 // 8, 80 * 1024 * 1024)
    dbuf_budget = vmem_limit // 3
    # 4 inputs, double-buffered, one 128-lane chunk each.
    bytes_per_chunk = 4 * 2 * n * 128 * itemsize
    c_max = max(1, dbuf_budget // bytes_per_chunk)

    c_total = _cdiv(d, 128)  # D in 128-lane chunks
    if c_total <= 1:
        # Whole feature dim fits in one (<=128-lane) tile: full-dim block
        # (no 128-divisibility requirement, no masking), single split.
        return 1, 1, d, vmem_limit
    num_splits = 2  # feeds both TensorCores on v7x; a cheap sequential outer
                    # loop on single-core v5e/v6e.
    c = min(c_max, _cdiv(c_total, num_splits))
    steps = _cdiv(c_total, num_splits * c)
    c = _cdiv(c_total, num_splits * steps)  # rebalance: waste stays < 1 tile
    return num_splits, steps, c * 128, vmem_limit


def semi_loss(sup_a, unsup_a, sup_b, unsup_b):
    """All four inputs are (N, D) feature matrices. Returns a scalar float32."""
    n, d = sup_a.shape
    if n < 1 or d < 1:
        raise ValueError("semi_loss requires non-empty (N, D) features")
    itemsize = jnp.dtype(sup_a.dtype).itemsize
    num_splits, steps, tile_d, vmem_limit = _plan(n, d, itemsize)
    need_mask = (num_splits * steps * tile_d) != d
    last_tile = _cdiv(d, tile_d) - 1

    def in_index_map(p, k):
        # Clamp fully out-of-range logical tiles onto the last valid tile; the
        # kernel masks them (by logical index) so they contribute zero.
        return 0, jnp.minimum(p * steps + k, last_tile)

    in_spec = pl.BlockSpec((n, tile_d), in_index_map)
    kernel = functools.partial(
        _partial_sums_kernel, steps_per_split=steps, tile_d=tile_d,
        d_total=d, need_mask=need_mask)

    cost = pl.CostEstimate(
        flops=12 * n * d,
        transcendentals=0,
        bytes_accessed=4 * n * d * itemsize + num_splits * 6 * n * 4)

    partial = pl.pallas_call(
        kernel,
        out_shape=jax.ShapeDtypeStruct((num_splits, 6, n, 1), jnp.float32),
        grid=(num_splits, steps),
        in_specs=[in_spec, in_spec, in_spec, in_spec],
        out_specs=pl.BlockSpec((1, 6, n, 1), lambda p, k: (p, 0, 0, 0)),
        compiler_params=pltpu.CompilerParams(
            dimension_semantics=("parallel", "arbitrary"),
            vmem_limit_bytes=int(vmem_limit),
        ),
        cost_estimate=cost,
    )(sup_a, unsup_a, sup_b, unsup_b)

    # O(N) epilogue in plain JAX (per perf review): combine per-split partial
    # sums, then cosine -> softmax over the batch -> KLDiv(batchmean) * 1000.
    parts = jnp.sum(partial, axis=0)[:, :, 0]  # (6, N)
    dot_a, nsa, nua, dot_b, nsb, nub = (parts[i] for i in range(6))

    eps = jnp.float32(_EPS)

    def cosine(dot, nx2, ny2):
        # dot / (max(||x||, eps) * max(||y||, eps)), matching
        # nn.CosineSimilarity's per-norm eps clamp.
        return dot / (jnp.maximum(jnp.sqrt(nx2), eps) *
                      jnp.maximum(jnp.sqrt(ny2), eps))

    log_a = jax.nn.log_softmax(cosine(dot_a, nsa, nua), axis=0)
    log_b = jax.nn.log_softmax(cosine(dot_b, nsb, nub), axis=0)
    # KLDivLoss(reduction='batchmean')(log softmax_A, softmax_B)
    #   = sum_i B[i] * (log B[i] - log A[i]) / N
    return 1000.0 * jnp.sum(jnp.exp(log_b) * (log_b - log_a)) / n


def _reference(sup_a, unsup_a, sup_b, unsup_b):
    def cos(x, y):
        x = x.astype(jnp.float32)
        y = y.astype(jnp.float32)
        dot = jnp.sum(x * y, axis=1)
        nx = jnp.maximum(jnp.sqrt(jnp.sum(x * x, axis=1)), _EPS)
        ny = jnp.maximum(jnp.sqrt(jnp.sum(y * y, axis=1)), _EPS)
        return dot / (nx * ny)

    log_a = jax.nn.log_softmax(cos(sup_a, unsup_a), axis=0)
    log_b = jax.nn.log_softmax(cos(sup_b, unsup_b), axis=0)
    n = sup_a.shape[0]
    return 1000.0 * jnp.sum(jnp.exp(log_b) * (log_b - log_a)) / n


if __name__ == "__main__":
    key = jax.random.PRNGKey(0)
    k1, k2, k3, k4, k5, k6, k7, k8 = jax.random.split(key, 8)

    # Primary small shape implied by the module: batch=8, hidden=32.
    N, D = 8, 32
    sup_a = jax.random.normal(k1, (N, D), dtype=jnp.float32)
    unsup_a = jax.random.normal(k2, (N, D), dtype=jnp.float32)
    sup_b = jax.random.normal(k3, (N, D), dtype=jnp.float32)
    unsup_b = jax.random.normal(k4, (N, D), dtype=jnp.float32)
    loss = jax.block_until_ready(semi_loss(sup_a, unsup_a, sup_b, unsup_b))
    ref = jax.block_until_ready(_reference(sup_a, unsup_a, sup_b, unsup_b))
    assert jnp.allclose(loss, ref, rtol=1e-4, atol=1e-3), (loss, ref)

    # Second small shape exercising the 2-way D split + masked tail tile
    # (D not a multiple of 128).
    N2, D2 = 8, 300
    xa = jax.random.normal(k5, (N2, D2), dtype=jnp.float32)
    xb = jax.random.normal(k6, (N2, D2), dtype=jnp.float32)
    xc = jax.random.normal(k7, (N2, D2), dtype=jnp.float32)
    xd = jax.random.normal(k8, (N2, D2), dtype=jnp.float32)
    loss2 = jax.block_until_ready(semi_loss(xa, xb, xc, xd))
    ref2 = jax.block_until_ready(_reference(xa, xb, xc, xd))
    assert jnp.allclose(loss2, ref2, rtol=1e-4, atol=1e-3), (loss2, ref2)

    print("KERNEL_OK")
</pallas_src>

<mosaic_0001>
module attributes {stable_mosaic.version = 11 : i64} {
  func.func @_partial_sums_kernel(%arg0: i32, %arg1: i32, %arg2: memref<8x32xf32, #tpu.memory_space<vmem>>, %arg3: memref<8x32xf32, #tpu.memory_space<vmem>>, %arg4: memref<8x32xf32, #tpu.memory_space<vmem>>, %arg5: memref<8x32xf32, #tpu.memory_space<vmem>>, %arg6: memref<1x6x8x1xf32, #tpu.memory_space<vmem>>) attributes {dimension_semantics = [#tpu.dimension_semantics<parallel>, #tpu.dimension_semantics<arbitrary>], iteration_bounds = array<i64: 1, 1>, scalar_prefetch = 0 : i64, scratch_operands = 0 : i64, tpu.core_type = #tpu.core_type<tc>, window_params = [{transform_indices = @transform_0, window_bounds = array<i64: 8, 32>}, {transform_indices = @transform_1, window_bounds = array<i64: 8, 32>}, {transform_indices = @transform_2, window_bounds = array<i64: 8, 32>}, {transform_indices = @transform_3, window_bounds = array<i64: 8, 32>}, {transform_indices = @transform_4, window_bounds = array<i64: 1, 6, 8, 1>}]} {
    %c0_i32 = arith.constant 0 : i32
    %0 = arith.cmpi eq, %arg1, %c0_i32 : i32
    %1 = arith.extui %0 : i1 to i32
    %c0_i32_0 = arith.constant 0 : i32
    %2 = arith.cmpi ne, %1, %c0_i32_0 : i32
    scf.if %2 {
      %cst_56 = arith.constant 0.000000e+00 : f32
      %61 = vector.broadcast %cst_56 : f32 to vector<1x6x8x1xf32>
      %c0_57 = arith.constant 0 : index
      %c0_58 = arith.constant 0 : index
      %c0_59 = arith.constant 0 : index
      %c0_60 = arith.constant 0 : index
      %62 = vector.load %arg6[%c0_57, %c0_58, %c0_59, %c0_60] : memref<1x6x8x1xf32, #tpu.memory_space<vmem>>, vector<1x6x8x1xf32>
      tpu.vector_store %arg6[%c0_57, %c0_58, %c0_59, %c0_60], %61 {strides = array<i32>} : memref<1x6x8x1xf32, #tpu.memory_space<vmem>>, vector<1x6x8x1xf32>,
    } else {
    }
    %c0 = arith.constant 0 : index
    %c0_1 = arith.constant 0 : index
    %3 = vector.load %arg2[%c0, %c0_1] : memref<8x32xf32, #tpu.memory_space<vmem>>, vector<8x32xf32>
    %c0_2 = arith.constant 0 : index
    %c0_3 = arith.constant 0 : index
    %4 = vector.load %arg3[%c0_2, %c0_3] : memref<8x32xf32, #tpu.memory_space<vmem>>, vector<8x32xf32>
    %c0_4 = arith.constant 0 : index
    %c0_5 = arith.constant 0 : index
    %5 = vector.load %arg4[%c0_4, %c0_5] : memref<8x32xf32, #tpu.memory_space<vmem>>, vector<8x32xf32>
    %c0_6 = arith.constant 0 : index
    %c0_7 = arith.constant 0 : index
    %6 = vector.load %arg5[%c0_6, %c0_7] : memref<8x32xf32, #tpu.memory_space<vmem>>, vector<8x32xf32>
    %c0_8 = arith.constant 0 : index
    %c0_9 = arith.constant 0 : index
    %c0_10 = arith.constant 0 : index
    %c0_11 = arith.constant 0 : index
    %7 = vector.load %arg6[%c0_8, %c0_9, %c0_10, %c0_11] : memref<1x6x8x1xf32, #tpu.memory_space<vmem>>, vector<1x1x8x1xf32>
    %8 = vector.shape_cast %7 : vector<1x1x8x1xf32> to vector<8x1xf32>
    %9 = arith.mulf %3, %4 : vector<8x32xf32>
    %cst = arith.constant dense<0.000000e+00> : vector<8xf32>
    %10 = vector.multi_reduction <add>, %9, %cst [1] : vector<8x32xf32> to vector<8xf32>
    %11 = vector.shape_cast %10 : vector<8xf32> to vector<8x1xf32>
    %12 = arith.addf %8, %11 : vector<8x1xf32>
    %c0_12 = arith.constant 0 : index
    %c0_13 = arith.constant 0 : index
    %c0_14 = arith.constant 0 : index
    %c0_15 = arith.constant 0 : index
    %13 = vector.load %arg6[%c0_12, %c0_13, %c0_14, %c0_15] : memref<1x6x8x1xf32, #tpu.memory_space<vmem>>, vector<1x1x8x1xf32>
    %14 = vector.shape_cast %13 : vector<1x1x8x1xf32> to vector<8x1xf32>
    %15 = vector.shape_cast %12 : vector<8x1xf32> to vector<1x1x8x1xf32>
    tpu.vector_store %arg6[%c0_12, %c0_13, %c0_14, %c0_15], %15 {strides = array<i32>} : memref<1x6x8x1xf32, #tpu.memory_space<vmem>>, vector<1x1x8x1xf32>,
    %c0_16 = arith.constant 0 : index
    %c1 = arith.constant 1 : index
    %c0_17 = arith.constant 0 : index
    %c0_18 = arith.constant 0 : index
    %16 = vector.load %arg6[%c0_16, %c1, %c0_17, %c0_18] : memref<1x6x8x1xf32, #tpu.memory_space<vmem>>, vector<1x1x8x1xf32>
    %17 = vector.shape_cast %16 : vector<1x1x8x1xf32> to vector<8x1xf32>
    %18 = arith.mulf %3, %3 : vector<8x32xf32>
    %cst_19 = arith.constant dense<0.000000e+00> : vector<8xf32>
    %19 = vector.multi_reduction <add>, %18, %cst_19 [1] : vector<8x32xf32> to vector<8xf32>
    %20 = vector.shape_cast %19 : vector<8xf32> to vector<8x1xf32>
    %21 = arith.addf %17, %20 : vector<8x1xf32>
    %c0_20 = arith.constant 0 : index
    %c1_21 = arith.constant 1 : index
    %c0_22 = arith.constant 0 : index
    %c0_23 = arith.constant 0 : index
    %22 = vector.load %arg6[%c0_20, %c1_21, %c0_22, %c0_23] : memref<1x6x8x1xf32, #tpu.memory_space<vmem>>, vector<1x1x8x1xf32>
    %23 = vector.shape_cast %22 : vector<1x1x8x1xf32> to vector<8x1xf32>
    %24 = vector.shape_cast %21 : vector<8x1xf32> to vector<1x1x8x1xf32>
    tpu.vector_store %arg6[%c0_20, %c1_21, %c0_22, %c0_23], %24 {strides = array<i32>} : memref<1x6x8x1xf32, #tpu.memory_space<vmem>>, vector<1x1x8x1xf32>,
    %c0_24 = arith.constant 0 : index
    %c2 = arith.constant 2 : index
    %c0_25 = arith.constant 0 : index
    %c0_26 = arith.constant 0 : index
    %25 = vector.load %arg6[%c0_24, %c2, %c0_25, %c0_26] : memref<1x6x8x1xf32, #tpu.memory_space<vmem>>, vector<1x1x8x1xf32>
    %26 = vector.shape_cast %25 : vector<1x1x8x1xf32> to vector<8x1xf32>
    %27 = arith.mulf %4, %4 : vector<8x32xf32>
    %cst_27 = arith.constant dense<0.000000e+00> : vector<8xf32>
    %28 = vector.multi_reduction <add>, %27, %cst_27 [1] : vector<8x32xf32> to vector<8xf32>
    %29 = vector.shape_cast %28 : vector<8xf32> to vector<8x1xf32>
    %30 = arith.addf %26, %29 : vector<8x1xf32>
    %c0_28 = arith.constant 0 : index
    %c2_29 = arith.constant 2 : index
    %c0_30 = arith.constant 0 : index
    %c0_31 = arith.constant 0 : index
    %31 = vector.load %arg6[%c0_28, %c2_29, %c0_30, %c0_31] : memref<1x6x8x1xf32, #tpu.memory_space<vmem>>, vector<1x1x8x1xf32>
    %32 = vector.shape_cast %31 : vector<1x1x8x1xf32> to vector<8x1xf32>
    %33 = vector.shape_cast %30 : vector<8x1xf32> to vector<1x1x8x1xf32>
    tpu.vector_store %arg6[%c0_28, %c2_29, %c0_30, %c0_31], %33 {strides = array<i32>} : memref<1x6x8x1xf32, #tpu.memory_space<vmem>>, vector<1x1x8x1xf32>,
    %c0_32 = arith.constant 0 : index
    %c3 = arith.constant 3 : index
    %c0_33 = arith.constant 0 : index
    %c0_34 = arith.constant 0 : index
    %34 = vector.load %arg6[%c0_32, %c3, %c0_33, %c0_34] : memref<1x6x8x1xf32, #tpu.memory_space<vmem>>, vector<1x1x8x1xf32>
    %35 = vector.shape_cast %34 : vector<1x1x8x1xf32> to vector<8x1xf32>
    %36 = arith.mulf %5, %6 : vector<8x32xf32>
    %cst_35 = arith.constant dense<0.000000e+00> : vector<8xf32>
    %37 = vector.multi_reduction <add>, %36, %cst_35 [1] : vector<8x32xf32> to vector<8xf32>
    %38 = vector.shape_cast %37 : vector<8xf32> to vector<8x1xf32>
    %39 = arith.addf %35, %38 : vector<8x1xf32>
    %c0_36 = arith.constant 0 : index
    %c3_37 = arith.constant 3 : index
    %c0_38 = arith.constant 0 : index
    %c0_39 = arith.constant 0 : index
    %40 = vector.load %arg6[%c0_36, %c3_37, %c0_38, %c0_39] : memref<1x6x8x1xf32, #tpu.memory_space<vmem>>, vector<1x1x8x1xf32>
    %41 = vector.shape_cast %40 : vector<1x1x8x1xf32> to vector<8x1xf32>
    %42 = vector.shape_cast %39 : vector<8x1xf32> to vector<1x1x8x1xf32>
    tpu.vector_store %arg6[%c0_36, %c3_37, %c0_38, %c0_39], %42 {strides = array<i32>} : memref<1x6x8x1xf32, #tpu.memory_space<vmem>>, vector<1x1x8x1xf32>,
    %c0_40 = arith.constant 0 : index
    %c4 = arith.constant 4 : index
    %c0_41 = arith.constant 0 : index
    %c0_42 = arith.constant 0 : index
    %43 = vector.load %arg6[%c0_40, %c4, %c0_41, %c0_42] : memref<1x6x8x1xf32, #tpu.memory_space<vmem>>, vector<1x1x8x1xf32>
    %44 = vector.shape_cast %43 : vector<1x1x8x1xf32> to vector<8x1xf32>
    %45 = arith.mulf %5, %5 : vector<8x32xf32>
    %cst_43 = arith.constant dense<0.000000e+00> : vector<8xf32>
    %46 = vector.multi_reduction <add>, %45, %cst_43 [1] : vector<8x32xf32> to vector<8xf32>
    %47 = vector.shape_cast %46 : vector<8xf32> to vector<8x1xf32>
    %48 = arith.addf %44, %47 : vector<8x1xf32>
    %c0_44 = arith.constant 0 : index
    %c4_45 = arith.constant 4 : index
    %c0_46 = arith.constant 0 : index
    %c0_47 = arith.constant 0 : index
    %49 = vector.load %arg6[%c0_44, %c4_45, %c0_46, %c0_47] : memref<1x6x8x1xf32, #tpu.memory_space<vmem>>, vector<1x1x8x1xf32>
    %50 = vector.shape_cast %49 : vector<1x1x8x1xf32> to vector<8x1xf32>
    %51 = vector.shape_cast %48 : vector<8x1xf32> to vector<1x1x8x1xf32>
    tpu.vector_store %arg6[%c0_44, %c4_45, %c0_46, %c0_47], %51 {strides = array<i32>} : memref<1x6x8x1xf32, #tpu.memory_space<vmem>>, vector<1x1x8x1xf32>,
    %c0_48 = arith.constant 0 : index
    %c5 = arith.constant 5 : index
    %c0_49 = arith.constant 0 : index
    %c0_50 = arith.constant 0 : index
    %52 = vector.load %arg6[%c0_48, %c5, %c0_49, %c0_50] : memref<1x6x8x1xf32, #tpu.memory_space<vmem>>, vector<1x1x8x1xf32>
    %53 = vector.shape_cast %52 : vector<1x1x8x1xf32> to vector<8x1xf32>
    %54 = arith.mulf %6, %6 : vector<8x32xf32>
    %cst_51 = arith.constant dense<0.000000e+00> : vector<8xf32>
    %55 = vector.multi_reduction <add>, %54, %cst_51 [1] : vector<8x32xf32> to vector<8xf32>
    %56 = vector.shape_cast %55 : vector<8xf32> to vector<8x1xf32>
    %57 = arith.addf %53, %56 : vector<8x1xf32>
    %c0_52 = arith.constant 0 : index
    %c5_53 = arith.constant 5 : index
    %c0_54 = arith.constant 0 : index
    %c0_55 = arith.constant 0 : index
    %58 = vector.load %arg6[%c0_52, %c5_53, %c0_54, %c0_55] : memref<1x6x8x1xf32, #tpu.memory_space<vmem>>, vector<1x1x8x1xf32>
    %59 = vector.shape_cast %58 : vector<1x1x8x1xf32> to vector<8x1xf32>
    %60 = vector.shape_cast %57 : vector<8x1xf32> to vector<1x1x8x1xf32>
    tpu.vector_store %arg6[%c0_52, %c5_53, %c0_54, %c0_55], %60 {strides = array<i32>} : memref<1x6x8x1xf32, #tpu.memory_space<vmem>>, vector<1x1x8x1xf32>,
    return
  }
  func.func @transform_0(%arg0: i32, %arg1: i32) -> (i32, i32) {
    %c1_i32 = arith.constant 1 : i32
    %0 = arith.muli %arg0, %c1_i32 : i32
    %1 = arith.addi %0, %arg1 : i32
    %c0_i32 = arith.constant 0 : i32
    %2 = arith.minsi %1, %c0_i32 : i32
    %c0_i32_0 = arith.constant 0 : i32
    %c0_i32_1 = arith.constant 0 : i32
    return %c0_i32_0, %2 : i32, i32
  }
  func.func @transform_1(%arg0: i32, %arg1: i32) -> (i32, i32) {
    %c1_i32 = arith.constant 1 : i32
    %0 = arith.muli %arg0, %c1_i32 : i32
    %1 = arith.addi %0, %arg1 : i32
    %c0_i32 = arith.constant 0 : i32
    %2 = arith.minsi %1, %c0_i32 : i32
    %c0_i32_0 = arith.constant 0 : i32
    %c0_i32_1 = arith.constant 0 : i32
    return %c0_i32_0, %2 : i32, i32
  }
  func.func @transform_2(%arg0: i32, %arg1: i32) -> (i32, i32) {
    %c1_i32 = arith.constant 1 : i32
    %0 = arith.muli %arg0, %c1_i32 : i32
    %1 = arith.addi %0, %arg1 : i32
    %c0_i32 = arith.constant 0 : i32
    %2 = arith.minsi %1, %c0_i32 : i32
    %c0_i32_0 = arith.constant 0 : i32
    %c0_i32_1 = arith.constant 0 : i32
    return %c0_i32_0, %2 : i32, i32
  }
  func.func @transform_3(%arg0: i32, %arg1: i32) -> (i32, i32) {
    %c1_i32 = arith.constant 1 : i32
    %0 = arith.muli %arg0, %c1_i32 : i32
    %1 = arith.addi %0, %arg1 : i32
    %c0_i32 = arith.constant 0 : i32
    %2 = arith.minsi %1, %c0_i32 : i32
    %c0_i32_0 = arith.constant 0 : i32
    %c0_i32_1 = arith.constant 0 : i32
    return %c0_i32_0, %2 : i32, i32
  }
  func.func @transform_4(%arg0: i32, %arg1: i32) -> (i32, i32, i32, i32) {
    %c0_i32 = arith.constant 0 : i32
    %c0_i32_0 = arith.constant 0 : i32
    %c0_i32_1 = arith.constant 0 : i32
    %c0_i32_2 = arith.constant 0 : i32
    return %arg0, %c0_i32, %c0_i32_0, %c0_i32_1 : i32, i32, i32, i32
  }
}

</mosaic_0001>

<llo_original>
// kernel: tpu_custom_call.1
$region0: #{tpu_custom_call.1}
  #allocation0 [shape = 'u32[]', space=smem, size = 0x4, offset = 0x4, fixed_abs, tag = 'smem constant byte address 0x4 - core index']
  #allocation1 [shape = 'u32[144,128]{1,0:T(1,128)}', space=vmem, size = 0x12000, scoped, tag = 'internal scratch']
  %s0 = inlined_call_operand.hbm [shape: f32[8,32], index: 0, kind: input, shape index: {}]
  %s1 = inlined_call_operand.hbm [shape: f32[8,32], index: 1, kind: input, shape index: {}]
  %s2 = inlined_call_operand.hbm [shape: f32[8,32], index: 2, kind: input, shape index: {}]
  %s3 = inlined_call_operand.hbm [shape: f32[8,32], index: 3, kind: input, shape index: {}]
  %s4 = inlined_call_operand.vmem [shape: f32[1,6,8,1], index: 4, kind: output, shape index: {}]
  %s5 = sld [smem:[#allocation0]]
  $region46: #{tpu_custom_call.1} parent=0
    _
  %s7 = ssub.s32 1, %s5
  %s8 = scalar_select 0, %s7, %s5
  $region1: #{tpu_custom_call.1} parent=0
    #allocation2 [shape = 'u8[4096]{0}', space=vmem, size = 0x1000, scoped, tag = 'input window, operand 0, single buffered']
    #allocation3 [shape = 's32[1]{0}', space=sflag, size = 0x4, scoped, tag = 'scoped memory for tpu_custom_call.1']
    #allocation4 [shape = 'u8[4096]{0}', space=vmem, size = 0x1000, scoped, tag = 'input window, operand 1, single buffered']
    #allocation5 [shape = 's32[1]{0}', space=sflag, size = 0x4, scoped, tag = 'scoped memory for tpu_custom_call.1']
    #allocation6 [shape = 'u8[4096]{0}', space=vmem, size = 0x1000, scoped, tag = 'input window, operand 2, single buffered']
    #allocation7 [shape = 'u8[4096]{0}', space=vmem, size = 0x1000, scoped, tag = 'input window, operand 3, single buffered']
    #allocation8 [shape = 's32[1]{0}', space=sflag, size = 0x4, scoped, tag = 'scoped memory for tpu_custom_call.1']
    %9 = vsyncpa [#allocation3], 0
    %10 = vsyncpa [#allocation5], 0
    %11 = vsyncpa [#allocation8], 0
    // Predicated region
    $region2: #{tpu_custom_call.1} parent=1 // pred_check
      _
    $region3: #{tpu_custom_call.1} parent=1 // pred_check_branch
      %13 = sbr.rel (0) target = $region5
    $region4: #{tpu_custom_call.1} parent=1 // pred_region
      %s14 = sadd.s32 0, 0
      %p15 = scmp.lt.s32.totalorder %s14, 0
      %s16 = scalar_select %p15, %s14, 0
      %s18 = ssub.s32 128, 128
      %19 = vsyncadd [#allocation3], %s18
      %s20 = smul.addr %s16, 128
      %s21 = scalar_lea.hbm %s0, %s20
      %s23 = sshll.u32 [#allocation2], 4
      %s24 = int_to_ptr.vmem [resolvable:$true] %s23
      %26 = dma.hbm_to_vmem [thread:$0]  %s21, 128, %s24, [#allocation3]
    $region5: #{tpu_custom_call.1} parent=1 // pred_fallthru
      _
    // Predicated region
    $region6: #{tpu_custom_call.1} parent=1 // pred_check
      _
    $region7: #{tpu_custom_call.1} parent=1 // pred_check_branch
      %28 = sbr.rel (0) target = $region9
    $region8: #{tpu_custom_call.1} parent=1 // pred_region
      %s29 = sadd.s32 0, 0
      %p30 = scmp.lt.s32.totalorder %s29, 0
      %s31 = scalar_select %p30, %s29, 0
      %s33 = ssub.s32 128, 128
      %34 = vsyncadd [#allocation5], %s33
      %s35 = smul.addr %s31, 128
      %s36 = scalar_lea.hbm %s1, %s35
      %s38 = sshll.u32 [#allocation4], 4
      %s39 = int_to_ptr.vmem [resolvable:$true] %s38
      %41 = dma.hbm_to_vmem [thread:$0]  %s36, 128, %s39, [#allocation5]
    $region9: #{tpu_custom_call.1} parent=1 // pred_fallthru
      _
    // Predicated region
    $region10: #{tpu_custom_call.1} parent=1 // pred_check
      _
    $region11: #{tpu_custom_call.1} parent=1 // pred_check_branch
      %43 = sbr.rel (0) target = $region13
    $region12: #{tpu_custom_call.1} parent=1 // pred_region
      %s44 = sadd.s32 0, 0
      %p45 = scmp.lt.s32.totalorder %s44, 0
      %s46 = scalar_select %p45, %s44, 0
      %s48 = ssub.s32 128, 128
      %49 = vsyncadd [#allocation5], %s48
      %s50 = smul.addr %s46, 128
      %s51 = scalar_lea.hbm %s2, %s50
      %s53 = sshll.u32 [#allocation6], 4
      %s54 = int_to_ptr.vmem [resolvable:$true] %s53
      %56 = dma.hbm_to_vmem [thread:$0]  %s51, 128, %s54, [#allocation5]
    $region13: #{tpu_custom_call.1} parent=1 // pred_fallthru
      _
    // Predicated region
    $region14: #{tpu_custom_call.1} parent=1 // pred_check
      _
    $region15: #{tpu_custom_call.1} parent=1 // pred_check_branch
      %58 = sbr.rel (0) target = $region17
    $region16: #{tpu_custom_call.1} parent=1 // pred_region
      %s59 = sadd.s32 0, 0
      %p60 = scmp.lt.s32.totalorder %s59, 0
      %s61 = scalar_select %p60, %s59, 0
      %s63 = ssub.s32 128, 128
      %64 = vsyncadd [#allocation8], %s63
      %s65 = smul.addr %s61, 128
      %s66 = scalar_lea.hbm %s3, %s65
      %s68 = sshll.u32 [#allocation7], 4
      %s69 = int_to_ptr.vmem [resolvable:$true] %s68
      %71 = dma.hbm_to_vmem [thread:$0]  %s66, 128, %s69, [#allocation8]
    $region17: #{tpu_custom_call.1} parent=1 // pred_fallthru
      _
    // Predicated region
    $region18: #{tpu_custom_call.1} parent=1 // pred_check
      _
    $region19: #{tpu_custom_call.1} parent=1 // pred_check_branch
      %73 = sbr.rel (0) target = $region21
    $region20: #{tpu_custom_call.1} parent=1 // pred_region
      %74 = dma.done [#allocation3], 128
    $region21: #{tpu_custom_call.1} parent=1 // pred_fallthru
      _
    // Predicated region
    $region22: #{tpu_custom_call.1} parent=1 // pred_check
      _
    $region23: #{tpu_custom_call.1} parent=1 // pred_check_branch
      %76 = sbr.rel (0) target = $region25
    $region24: #{tpu_custom_call.1} parent=1 // pred_region
      %77 = dma.done [#allocation5], 128
    $region25: #{tpu_custom_call.1} parent=1 // pred_fallthru
      _
    // Predicated region
    $region26: #{tpu_custom_call.1} parent=1 // pred_check
      _
    $region27: #{tpu_custom_call.1} parent=1 // pred_check_branch
      %79 = sbr.rel (0) target = $region29
    $region28: #{tpu_custom_call.1} parent=1 // pred_region
      %80 = dma.done [#allocation5], 128
    $region29: #{tpu_custom_call.1} parent=1 // pred_fallthru
      _
    // Predicated region
    $region30: #{tpu_custom_call.1} parent=1 // pred_check
      _
    $region31: #{tpu_custom_call.1} parent=1 // pred_check_branch
      %82 = sbr.rel (0) target = $region33
    $region32: #{tpu_custom_call.1} parent=1 // pred_region
      %83 = dma.done [#allocation8], 128
    $region33: #{tpu_custom_call.1} parent=1 // pred_fallthru
      _
    %s84 = sadd.s32 0, 0
    %p85 = scmp.lt.s32.totalorder %s84, 0
    %s86 = scalar_select %p85, %s84, 0
    %s87 = sadd.s32 0, 0
    %p88 = scmp.lt.s32.totalorder %s87, 0
    %s89 = scalar_select %p88, %s87, 0
    %s90 = sadd.s32 0, 0
    %p91 = scmp.lt.s32.totalorder %s90, 0
    %s92 = scalar_select %p91, %s90, 0
    %s93 = sadd.s32 0, 0
    %p94 = scmp.lt.s32.totalorder %s93, 0
    %s95 = scalar_select %p94, %s93, 0
    %p96 = scmp.eq.s32.totalorder 0, 0
    // Predicated region
    $region34: #{tpu_custom_call.1} parent=1 // pred_check
      %p97 = pneg %p96
    $region35: #{tpu_custom_call.1} parent=1 // pred_check_branch
      %99 = sbr.rel (%p97) target = $region37
    $region36: #{tpu_custom_call.1} parent=1 // pred_region
      %vm100 = vcmask 7168
      %101 = vst.msk [vmem:[%s4] sm:$0xff] %vm100, 0.0
      %102 = vst.msk [vmem:[%s4 + $0x8] sm:$0xff] %vm100, 0.0
      %103 = vst.msk [vmem:[%s4 + $0x10] sm:$0xff] %vm100, 0.0
      %104 = vst.msk [vmem:[%s4 + $0x18] sm:$0xff] %vm100, 0.0
      %105 = vst.msk [vmem:[%s4 + $0x20] sm:$0xff] %vm100, 0.0
      %106 = vst.msk [vmem:[%s4 + $0x28] sm:$0xff] %vm100, 0.0
    $region37: #{tpu_custom_call.1} parent=1 // pred_fallthru
      _
    %v107 = vld [vmem:[#allocation2] sm:$0xff]
    %v108 = vld [vmem:[#allocation4] sm:$0xff]
    %v109 = vld [vmem:[#allocation6] sm:$0xff]
    %v110 = vld [vmem:[#allocation7] sm:$0xff]
    %v111 = vld [vmem:[%s4] sm:$0xff]
    %v112 = vmul.f32 %v107, %v108
    %vm113 = vcmask 261120
    %v114 = vsel %vm113, %v112, 0.0
    %115 = vadd.xlane.f32.xlu0 %v114
    %v116 = vpop.xlane.xlu0 %115
    %v117 = vadd.f32 %v111, %v116
    %vm118 = vcmask 7168
    %119 = vst.msk [vmem:[%s4] sm:$0xff] %vm118, %v117
    %s120 = scalar_lea.vmem %s4, 8
    %v121 = vld [vmem:[%s120] sm:$0xff]
    %v122 = vmul.f32 %v107, %v107
    %v123 = vsel %vm113, %v122, 0.0
    %124 = vadd.xlane.f32.xlu0 %v123
    %v125 = vpop.xlane.xlu0 %124
    %v126 = vadd.f32 %v121, %v125
    %127 = vst.msk [vmem:[%s120] sm:$0xff] %vm118, %v126
    %s128 = scalar_lea.vmem %s4, 16
    %v129 = vld [vmem:[%s128] sm:$0xff]
    %v130 = vmul.f32 %v108, %v108
    %v131 = vsel %vm113, %v130, 0.0
    %132 = vadd.xlane.f32.xlu0 %v131
    %v133 = vpop.xlane.xlu0 %132
    %v134 = vadd.f32 %v129, %v133
    %135 = vst.msk [vmem:[%s128] sm:$0xff] %vm118, %v134
    %s136 = scalar_lea.vmem %s4, 24
    %v137 = vld [vmem:[%s136] sm:$0xff]
    %v138 = vmul.f32 %v109, %v110
    %v139 = vsel %vm113, %v138, 0.0
    %140 = vadd.xlane.f32.xlu0 %v139
    %v141 = vpop.xlane.xlu0 %140
    %v142 = vadd.f32 %v137, %v141
    %143 = vst.msk [vmem:[%s136] sm:$0xff] %vm118, %v142
    %s144 = scalar_lea.vmem %s4, 32
    %v145 = vld [vmem:[%s144] sm:$0xff]
    %v146 = vmul.f32 %v109, %v109
    %v147 = vsel %vm113, %v146, 0.0
    %148 = vadd.xlane.f32.xlu0 %v147
    %v149 = vpop.xlane.xlu0 %148
    %v150 = vadd.f32 %v145, %v149
    %151 = vst.msk [vmem:[%s144] sm:$0xff] %vm118, %v150
    %s152 = scalar_lea.vmem %s4, 40
    %v153 = vld [vmem:[%s152] sm:$0xff]
    %v154 = vmul.f32 %v110, %v110
    %v155 = vsel %vm113, %v154, 0.0
    %156 = vadd.xlane.f32.xlu0 %v155
    %v157 = vpop.xlane.xlu0 %156
    %v158 = vadd.f32 %v153, %v157
    %159 = vst.msk [vmem:[%s152] sm:$0xff] %vm118, %v158
    // Predicated region
    $region38: #{tpu_custom_call.1} parent=1 // pred_check
      _
    $region39: #{tpu_custom_call.1} parent=1 // pred_check_branch
      %161 = sbr.rel (0) target = $region41
    $region40: #{tpu_custom_call.1} parent=1 // pred_region
      _
    $region41: #{tpu_custom_call.1} parent=1 // pred_fallthru
      _
    // Predicated region
    $region42: #{tpu_custom_call.1} parent=1 // pred_check
      _
    $region43: #{tpu_custom_call.1} parent=1 // pred_check_branch
      %163 = sbr.rel (0) target = $region45
    $region44: #{tpu_custom_call.1} parent=1 // pred_region
      _
    $region45: #{tpu_custom_call.1} parent=1 // pred_fallthru
      _
    %164 = vsyncpa [#allocation3], 1
    %165 = vsyncpa [#allocation5], 1
    %166 = vsyncpa [#allocation8], 1

</llo_original>
